<compile_context>
chip_gen: v7x
topology: tpu7x:2x2x1
jax: 0.10.0
libtpu: 0.0.40
codegen_flags: <defaults>
</compile_context>

<pallas_src>
import math

import jax
import jax.numpy as jnp
from jax.experimental import pallas as pl
from jax.experimental.pallas import tpu as pltpu


# ----------------------------------------------------------------------------
# Parameter construction (deterministic, synthetic)
# ----------------------------------------------------------------------------
def sinusoidal_table(T, d_model):
    """Replicates TimeEmbedding's fixed embedding table."""
    assert d_model % 2 == 0
    emb = jnp.arange(0, d_model, 2, dtype=jnp.float32) / d_model * math.log(10000.0)
    emb = jnp.exp(-emb)                                     # (d_model//2,)
    pos = jnp.arange(T, dtype=jnp.float32)                  # (T,)
    emb = pos[:, None] * emb[None, :]                       # (T, d_model//2)
    emb = jnp.stack([jnp.sin(emb), jnp.cos(emb)], axis=-1)  # (T, d_model//2, 2)
    return emb.reshape(T, d_model)                          # (T, d_model)


def xavier_uniform(key, fan_in, fan_out, dtype=jnp.float32):
    limit = math.sqrt(6.0 / (fan_in + fan_out))
    return jax.random.uniform(key, (fan_in, fan_out), dtype, -limit, limit)


def make_params(key, T, in_ch):
    """All weights stored already transposed to (in, out): y = x @ W + b."""
    tdim = in_ch // 2
    k = jax.random.split(key, 8)
    return dict(
        emb_table=sinusoidal_table(T, in_ch),
        # TimeEmbedding MLP: Linear(in_ch, tdim) -> Swish -> Linear(tdim, tdim)
        wte1=xavier_uniform(k[0], in_ch, tdim),
        bte1=jnp.zeros((1, tdim), jnp.float32),
        wte2=xavier_uniform(k[1], tdim, tdim),
        bte2=jnp.zeros((1, tdim), jnp.float32),
        # fc1, fc1_1 : Linear(in_ch, tdim)
        w1=xavier_uniform(k[2], in_ch, tdim),
        b1=jax.random.normal(k[3], (1, tdim), jnp.float32) * 0.02,
        w11=xavier_uniform(k[4], in_ch, tdim),
        b11=jax.random.normal(k[5], (1, tdim), jnp.float32) * 0.02,
        # fc2 : Linear(tdim, in_ch)
        w2=xavier_uniform(k[6], tdim, in_ch),
        b2=jax.random.normal(k[7], (1, in_ch), jnp.float32) * 0.02,
    )


# ----------------------------------------------------------------------------
# Pallas kernel: per (batch, seq-tile) fused fc1 + fc1_1 + bias(temb) + swish + fc2
# ----------------------------------------------------------------------------
def _fused_kernel(x_ref, y_ref, bias_ref, w1_ref, w11_ref, w2_ref, b2_ref, o_ref):
    # x_ref   : (1, St, in_ch)   streamed tile of x
    # y_ref   : (1, St, in_ch)   streamed tile of y
    # bias_ref: (1, 1, tdim)     per-batch bias = temb + b1 + b11 (VMEM-resident)
    # w1_ref  : (in_ch, tdim)    fc1 weight   (VMEM-resident across the grid)
    # w11_ref : (in_ch, tdim)    fc1_1 weight (VMEM-resident)
    # w2_ref  : (tdim, in_ch)    fc2 weight   (VMEM-resident)
    # b2_ref  : (1, in_ch)       fc2 bias     (VMEM-resident)
    # o_ref   : (1, St, in_ch)   streamed output tile
    x = x_ref[0]                                            # (St, in_ch)
    y = y_ref[0]                                            # (St, in_ch)
    h = jnp.dot(x, w1_ref[...], preferred_element_type=jnp.float32)
    h = h + jnp.dot(y, w11_ref[...], preferred_element_type=jnp.float32)
    h = h + bias_ref[0]                                     # (1, tdim) broadcast over rows
    h = h * jax.nn.sigmoid(h)                               # Swish
    # TODO(synk): F.dropout with training=True not implemented; eval mode (identity).
    out = jnp.dot(h, w2_ref[...], preferred_element_type=jnp.float32) + b2_ref[...]
    o_ref[0] = out.astype(o_ref.dtype)


def _pick_seq_tile(S, target=512):
    """Largest seq tile <= target that divides S (prefer a multiple of 8)."""
    if S <= target:
        return S
    if S % 8 == 0:
        start = target - (target % 8)
        for st in range(start, 7, -8):
            if S % st == 0:
                return st
    for st in range(target, 0, -1):
        if S % st == 0:
            return st
    return S


@jax.jit
def audio_noise_pre(x, t, y, params):
    B, S, in_ch = x.shape
    tdim = in_ch // 2

    # ---- plain-JAX glue: time-embedding MLP (1-row matmuls, ~0% MXU util) ----
    et = jnp.take(params["emb_table"], t, axis=0)            # (B, in_ch)
    t0 = et @ params["wte1"] + params["bte1"]
    t0 = t0 * jax.nn.sigmoid(t0)                             # Swish
    temb = t0 @ params["wte2"] + params["bte2"]              # (B, tdim)

    # Combined per-batch bias (broadcast over the sequence happens in-kernel).
    bias = (temb + params["b1"] + params["b11"]).reshape(B, 1, tdim)

    St = _pick_seq_tile(S)                                   # v7x: ~512; v5e/v6e can go larger
    grid = (B, S // St)

    out = pl.pallas_call(
        _fused_kernel,
        out_shape=jax.ShapeDtypeStruct((B, S, in_ch), jnp.float32),
        grid=grid,
        in_specs=[
            pl.BlockSpec((1, St, in_ch), lambda b, s: (b, s, 0)),   # x tile (streamed)
            pl.BlockSpec((1, St, in_ch), lambda b, s: (b, s, 0)),   # y tile (streamed)
            pl.BlockSpec((1, 1, tdim), lambda b, s: (b, 0, 0)),     # per-batch bias
            pl.BlockSpec((in_ch, tdim), lambda b, s: (0, 0)),       # w1   (resident)
            pl.BlockSpec((in_ch, tdim), lambda b, s: (0, 0)),       # w11  (resident)
            pl.BlockSpec((tdim, in_ch), lambda b, s: (0, 0)),       # w2   (resident)
            pl.BlockSpec((1, in_ch), lambda b, s: (0, 0)),          # b2   (resident)
        ],
        out_specs=pl.BlockSpec((1, St, in_ch), lambda b, s: (b, s, 0)),
        compiler_params=pltpu.CompilerParams(
            # Both grid axes are independent: lets v7x split them across its 2 TCs.
            dimension_semantics=("parallel", "parallel"),
        ),
    )(x, y, bias, params["w1"], params["w11"], params["w2"], params["b2"])

    return out.astype(x.dtype)


# ----------------------------------------------------------------------------
# Pure-JAX reference (mirrors the PyTorch forward, eval mode)
# ----------------------------------------------------------------------------
def reference(x, t, y, p):
    et = jnp.take(p["emb_table"], t, axis=0)                 # (B, in_ch)
    t0 = et @ p["wte1"] + p["bte1"]
    t0 = t0 * jax.nn.sigmoid(t0)
    temb = (t0 @ p["wte2"] + p["bte2"])[:, None, :]          # (B, 1, tdim)
    h = x @ p["w1"] + p["b1"] + temb + (y @ p["w11"] + p["b11"])
    h = h * jax.nn.sigmoid(h)
    return h @ p["w2"] + p["b2"]


# ----------------------------------------------------------------------------
if __name__ == "__main__":
    T, ch, dropout, in_ch = 16, 8, 0.1, 32     # ch is unused by the module
    B, S = 2, 8

    key = jax.random.PRNGKey(0)
    kx, ky, kt, kp = jax.random.split(key, 4)

    params = make_params(kp, T, in_ch)
    x = jax.random.normal(kx, (B, S, in_ch), jnp.float32)
    y = jax.random.normal(ky, (B, S, in_ch), jnp.float32)
    t = jax.random.randint(kt, (B,), 0, T, dtype=jnp.int32)

    out = audio_noise_pre(x, t, y, params)
    out = jax.block_until_ready(out)

    ref = reference(x, t, y, params)
    assert out.shape == (B, S, in_ch)
    assert jnp.allclose(out, ref, atol=1e-4, rtol=1e-4), "mismatch vs reference"

    print("KERNEL_OK")
</pallas_src>

<mosaic_0001>
module attributes {stable_mosaic.version = 11 : i64} {
  func.func @_fused_kernel(%arg0: i32, %arg1: i32, %arg2: memref<1x8x32xf32, #tpu.memory_space<vmem>>, %arg3: memref<1x8x32xf32, #tpu.memory_space<vmem>>, %arg4: memref<1x1x16xf32, #tpu.memory_space<vmem>>, %arg5: memref<32x16xf32, #tpu.memory_space<vmem>>, %arg6: memref<32x16xf32, #tpu.memory_space<vmem>>, %arg7: memref<16x32xf32, #tpu.memory_space<vmem>>, %arg8: memref<1x32xf32, #tpu.memory_space<vmem>>, %arg9: memref<1x8x32xf32, #tpu.memory_space<vmem>>) attributes {dimension_semantics = [#tpu.dimension_semantics<parallel>, #tpu.dimension_semantics<parallel>], iteration_bounds = array<i64: 2, 1>, scalar_prefetch = 0 : i64, scratch_operands = 0 : i64, tpu.core_type = #tpu.core_type<tc>, window_params = [{transform_indices = @transform_0, window_bounds = array<i64: 1, 8, 32>}, {transform_indices = @transform_1, window_bounds = array<i64: 1, 8, 32>}, {transform_indices = @transform_2, window_bounds = array<i64: 1, 1, 16>}, {pipeline_mode = #tpu.pipeline_mode<synchronous>, transform_indices = @transform_3, window_bounds = array<i64: 32, 16>}, {pipeline_mode = #tpu.pipeline_mode<synchronous>, transform_indices = @transform_4, window_bounds = array<i64: 32, 16>}, {pipeline_mode = #tpu.pipeline_mode<synchronous>, transform_indices = @transform_5, window_bounds = array<i64: 16, 32>}, {pipeline_mode = #tpu.pipeline_mode<synchronous>, transform_indices = @transform_6, window_bounds = array<i64: 1, 32>}, {transform_indices = @transform_7, window_bounds = array<i64: 1, 8, 32>}]} {
    %c0 = arith.constant 0 : index
    %c0_0 = arith.constant 0 : index
    %c0_1 = arith.constant 0 : index
    %0 = vector.load %arg2[%c0, %c0_0, %c0_1] : memref<1x8x32xf32, #tpu.memory_space<vmem>>, vector<1x8x32xf32>
    %1 = vector.shape_cast %0 : vector<1x8x32xf32> to vector<8x32xf32>
    %c0_2 = arith.constant 0 : index
    %c0_3 = arith.constant 0 : index
    %c0_4 = arith.constant 0 : index
    %2 = vector.load %arg3[%c0_2, %c0_3, %c0_4] : memref<1x8x32xf32, #tpu.memory_space<vmem>>, vector<1x8x32xf32>
    %3 = vector.shape_cast %2 : vector<1x8x32xf32> to vector<8x32xf32>
    %c0_5 = arith.constant 0 : index
    %c0_6 = arith.constant 0 : index
    %4 = vector.load %arg5[%c0_5, %c0_6] : memref<32x16xf32, #tpu.memory_space<vmem>>, vector<32x16xf32>
    %cst = arith.constant dense<0.000000e+00> : vector<8x16xf32>
    %5 = tpu.matmul %1, %4, %cst {dimension_numbers = #tpu.dot_dimension_numbers<[1], [0], [0], [1], [0, 0, 1, 1], [], []>} : vector<8x32xf32>, vector<32x16xf32>, vector<8x16xf32> -> vector<8x16xf32>
    %c0_7 = arith.constant 0 : index
    %c0_8 = arith.constant 0 : index
    %6 = vector.load %arg6[%c0_7, %c0_8] : memref<32x16xf32, #tpu.memory_space<vmem>>, vector<32x16xf32>
    %cst_9 = arith.constant dense<0.000000e+00> : vector<8x16xf32>
    %7 = tpu.matmul %3, %6, %cst_9 {dimension_numbers = #tpu.dot_dimension_numbers<[1], [0], [0], [1], [0, 0, 1, 1], [], []>} : vector<8x32xf32>, vector<32x16xf32>, vector<8x16xf32> -> vector<8x16xf32>
    %8 = arith.addf %5, %7 : vector<8x16xf32>
    %c0_10 = arith.constant 0 : index
    %c0_11 = arith.constant 0 : index
    %c0_12 = arith.constant 0 : index
    %9 = vector.load %arg4[%c0_10, %c0_11, %c0_12] : memref<1x1x16xf32, #tpu.memory_space<vmem>>, vector<1x1x16xf32>
    %10 = vector.shape_cast %9 : vector<1x1x16xf32> to vector<1x16xf32>
    %11 = vector.broadcast %10 : vector<1x16xf32> to vector<8x16xf32>
    %12 = arith.addf %8, %11 : vector<8x16xf32>
    %13 = arith.negf %12 : vector<8x16xf32>
    %14 = math.exp %13 : vector<8x16xf32>
    %cst_13 = arith.constant 1.000000e+00 : f32
    %15 = vector.broadcast %cst_13 : f32 to vector<8x16xf32>
    %16 = arith.addf %15, %14 : vector<8x16xf32>
    %17 = arith.divf %15, %16 : vector<8x16xf32>
    %18 = arith.mulf %12, %17 : vector<8x16xf32>
    %c0_14 = arith.constant 0 : index
    %c0_15 = arith.constant 0 : index
    %19 = vector.load %arg7[%c0_14, %c0_15] : memref<16x32xf32, #tpu.memory_space<vmem>>, vector<16x32xf32>
    %cst_16 = arith.constant dense<0.000000e+00> : vector<8x32xf32>
    %20 = tpu.matmul %18, %19, %cst_16 {dimension_numbers = #tpu.dot_dimension_numbers<[1], [0], [0], [1], [0, 0, 1, 1], [], []>} : vector<8x16xf32>, vector<16x32xf32>, vector<8x32xf32> -> vector<8x32xf32>
    %c0_17 = arith.constant 0 : index
    %c0_18 = arith.constant 0 : index
    %21 = vector.load %arg8[%c0_17, %c0_18] : memref<1x32xf32, #tpu.memory_space<vmem>>, vector<1x32xf32>
    %22 = vector.broadcast %21 : vector<1x32xf32> to vector<8x32xf32>
    %23 = arith.addf %20, %22 : vector<8x32xf32>
    %c0_19 = arith.constant 0 : index
    %c0_20 = arith.constant 0 : index
    %c0_21 = arith.constant 0 : index
    %24 = vector.load %arg9[%c0_19, %c0_20, %c0_21] : memref<1x8x32xf32, #tpu.memory_space<vmem>>, vector<1x8x32xf32>
    %25 = vector.shape_cast %24 : vector<1x8x32xf32> to vector<8x32xf32>
    %26 = vector.shape_cast %23 : vector<8x32xf32> to vector<1x8x32xf32>
    tpu.vector_store %arg9[%c0_19, %c0_20, %c0_21], %26 {strides = array<i32>} : memref<1x8x32xf32, #tpu.memory_space<vmem>>, vector<1x8x32xf32>,
    return
  }
  func.func @transform_0(%arg0: i32, %arg1: i32) -> (i32, i32, i32) {
    %c0_i32 = arith.constant 0 : i32
    %c0_i32_0 = arith.constant 0 : i32
    return %arg0, %arg1, %c0_i32 : i32, i32, i32
  }
  func.func @transform_1(%arg0: i32, %arg1: i32) -> (i32, i32, i32) {
    %c0_i32 = arith.constant 0 : i32
    %c0_i32_0 = arith.constant 0 : i32
    return %arg0, %arg1, %c0_i32 : i32, i32, i32
  }
  func.func @transform_2(%arg0: i32, %arg1: i32) -> (i32, i32, i32) {
    %c0_i32 = arith.constant 0 : i32
    %c0_i32_0 = arith.constant 0 : i32
    %c0_i32_1 = arith.constant 0 : i32
    return %arg0, %c0_i32, %c0_i32_0 : i32, i32, i32
  }
  func.func @transform_3(%arg0: i32, %arg1: i32) -> (i32, i32) {
    %c0_i32 = arith.constant 0 : i32
    %c0_i32_0 = arith.constant 0 : i32
    %c0_i32_1 = arith.constant 0 : i32
    return %c0_i32, %c0_i32_0 : i32, i32
  }
  func.func @transform_4(%arg0: i32, %arg1: i32) -> (i32, i32) {
    %c0_i32 = arith.constant 0 : i32
    %c0_i32_0 = arith.constant 0 : i32
    %c0_i32_1 = arith.constant 0 : i32
    return %c0_i32, %c0_i32_0 : i32, i32
  }
  func.func @transform_5(%arg0: i32, %arg1: i32) -> (i32, i32) {
    %c0_i32 = arith.constant 0 : i32
    %c0_i32_0 = arith.constant 0 : i32
    %c0_i32_1 = arith.constant 0 : i32
    return %c0_i32, %c0_i32_0 : i32, i32
  }
  func.func @transform_6(%arg0: i32, %arg1: i32) -> (i32, i32) {
    %c0_i32 = arith.constant 0 : i32
    %c0_i32_0 = arith.constant 0 : i32
    %c0_i32_1 = arith.constant 0 : i32
    return %c0_i32, %c0_i32_0 : i32, i32
  }
  func.func @transform_7(%arg0: i32, %arg1: i32) -> (i32, i32, i32) {
    %c0_i32 = arith.constant 0 : i32
    %c0_i32_0 = arith.constant 0 : i32
    return %arg0, %arg1, %c0_i32 : i32, i32, i32
  }
}

</mosaic_0001>

<llo_original>
// kernel: audio_noise_pre.1
$region0: #{audio_noise_pre.1}
  #allocation0 [shape = 'u32[]', space=smem, size = 0x4, offset = 0x4, fixed_abs, tag = 'smem constant byte address 0x4 - core index']
  #allocation1 [shape = 'u32[144,128]{1,0:T(1,128)}', space=vmem, size = 0x12000, scoped, tag = 'internal scratch']
  %s0 = inlined_call_operand.vmem [shape: f32[2,8,32], index: 0, kind: input, shape index: {}]
  %s1 = inlined_call_operand.vmem [shape: f32[2,8,32], index: 1, kind: input, shape index: {}]
  %s2 = inlined_call_operand.vmem [shape: f32[2,1,16], index: 2, kind: input, shape index: {}]
  %s3 = inlined_call_operand.vmem [shape: f32[32,16], index: 3, kind: input, shape index: {}]
  %s4 = inlined_call_operand.vmem [shape: f32[32,16], index: 4, kind: input, shape index: {}]
  %s5 = inlined_call_operand.vmem [shape: f32[16,32], index: 5, kind: input, shape index: {}]
  %s6 = inlined_call_operand.vmem [shape: f32[1,32], index: 6, kind: input, shape index: {}]
  %s7 = inlined_call_operand.hbm [shape: f32[2,8,32], index: 7, kind: output, shape index: {}]
  %s8 = sld [smem:[#allocation0]]
  $region61: #{audio_noise_pre.1} parent=0
    _
  %s10 = ssub.s32 1, %s8
  %s11 = scalar_select 0, %s10, %s8
  $region1: #{audio_noise_pre.1} parent=0
    #allocation2 [shape = 'u8[8192]{0}', space=vmem, size = 0x2000, scoped, tag = 'output window, operand 0']
    #allocation3 [shape = 's32[2]{0}', space=sflag, size = 0x8, scoped, tag = 'scoped memory for audio_noise_pre.1']
    %12 = vsyncpa [#allocation3], 0
    %s13 = scalar_lea.sflag [#allocation3], 1
    %14 = vsyncpa %s13, 0
    loop: start=0, step=1, limit=4
    $region2: #{audio_noise_pre.1} parent=1 // loop_pre_header
      _
    $region3: #{audio_noise_pre.1} parent=1 // loop_header
      %s16 = sphi 0, %s20
      %p17 = scmp.ge.s32.totalorder %s16, 4
      %s23 = sphi 0, %s35
      %s24 = sphi 0, %s31
      %s25 = sphi 0, %s23
      %s26 = sphi 0, %s24
      %s27 = sphi 0, %s25
      %s28 = sphi 0, %s26
      %s40 = sphi 0, %s42
      %s43 = sphi 0, %s40
      %s44 = sphi 0, %s43
      %s60 = sphi 0, %s44
      %s68 = sphi 0, %s70
      %s71 = sphi 0, %s68
      %s72 = sphi 0, %s71
      %s88 = sphi 0, %s72
      %s94 = sphi 0, %s96
      %s97 = sphi 0, %s94
      %s98 = sphi 0, %s97
      %s114 = sphi 0, %s98
      %s118 = sphi 0, %s118
      %s120 = sphi 0, %s118
      %s121 = sphi 0, %s120
      %s135 = sphi 0, %s121
      %s139 = sphi 0, %s139
      %s141 = sphi 0, %s139
      %s142 = sphi 0, %s141
      %s156 = sphi 0, %s142
      %s160 = sphi 0, %s160
      %s162 = sphi 0, %s160
      %s163 = sphi 0, %s162
      %s177 = sphi 0, %s163
      %s181 = sphi 0, %s181
      %s183 = sphi 0, %s181
      %s184 = sphi 0, %s183
      %s198 = sphi 0, %s184
      %s206 = sphi 0, %s208
      %s209 = sphi 0, %s206
      %s210 = sphi 0, %s209
      %s226 = sphi 0, %s210
    $region4: #{audio_noise_pre.1} parent=1 // loop_header_branch
      %19 = sbr.rel (%p17) target = $region8
    $region5: #{audio_noise_pre.1} parent=1 // loop_body
      %s21 = ssub.s32 %s16, 1
      %s22 = ssub.s32 %s16, 2
      %s29 = sadd.s32 1, %s24
      %p30 = scmp.ge.s32.totalorder %s29, 1
      %s31 = scalar_select %p30, 0, %s29
      %s32 = sadd.s32 1, %s23
      %s33 = scalar_select %p30, %s32, %s23
      %p34 = scmp.ge.s32.totalorder %s33, 2
      %s35 = scalar_select %p34, 0, %s33
      %s36 = ssub.s32 %s23, %s35
      %s37 = ssub.s32 %s24, %s31
      %s38 = sor.u32 %s36, %s37
      %p39 = scmp.eq.s32.totalorder %s38, 0
      %s41 = sadd.s32 %s40, 1
      %s42 = scalar_select %p39, %s40, %s41
      %p45 = pneg %p39
      %p46 = scmp.eq.s32.totalorder %s16, 1
      %p47 = por %p45, %p46
      %p48 = scmp.ne.s32.totalorder %s40, %s43
      %p49 = scmp.eq.s32.totalorder %s16, 0
      %p50 = por %p48, %p49
      %p51 = scmp.ne.s32.totalorder %s40, %s43
      %p52 = scmp.eq.s32.totalorder %s21, 1
      %p53 = por %p51, %p52
      %p54 = scmp.ne.s32.totalorder %s43, %s44
      %p55 = scmp.eq.s32.totalorder %s21, 0
      %p56 = por %p54, %p55
      %p57 = scmp.ne.s32.totalorder %s43, %s44
      %p58 = scmp.eq.s32.totalorder %s22, 1
      %p59 = por %p57, %p58
      %p61 = scmp.ne.s32.totalorder %s44, %s60
      %p62 = scmp.eq.s32.totalorder %s22, 0
      %p63 = por %p61, %p62
      %s64 = ssub.s32 %s23, %s35
      %s65 = ssub.s32 %s24, %s31
      %s66 = sor.u32 %s64, %s65
      %p67 = scmp.eq.s32.totalorder %s66, 0
      %s69 = sadd.s32 %s68, 1
      %s70 = scalar_select %p67, %s68, %s69
      %p73 = pneg %p67
      %p74 = scmp.eq.s32.totalorder %s16, 1
      %p75 = por %p73, %p74
      %p76 = scmp.ne.s32.totalorder %s68, %s71
      %p77 = scmp.eq.s32.totalorder %s16, 0
      %p78 = por %p76, %p77
      %p79 = scmp.ne.s32.totalorder %s68, %s71
      %p80 = scmp.eq.s32.totalorder %s21, 1
      %p81 = por %p79, %p80
      %p82 = scmp.ne.s32.totalorder %s71, %s72
      %p83 = scmp.eq.s32.totalorder %s21, 0
      %p84 = por %p82, %p83
      %p85 = scmp.ne.s32.totalorder %s71, %s72
      %p86 = scmp.eq.s32.totalorder %s22, 1
      %p87 = por %p85, %p86
      %p89 = scmp.ne.s32.totalorder %s72, %s88
      %p90 = scmp.eq.s32.totalorder %s22, 0
      %p91 = por %p89, %p90
      %s92 = ssub.s32 %s23, %s35
      %p93 = scmp.eq.s32.totalorder %s92, 0
      %s95 = sadd.s32 %s94, 1
      %s96 = scalar_select %p93, %s94, %s95
      %p99 = pneg %p93
      %p100 = scmp.eq.s32.totalorder %s16, 1
      %p101 = por %p99, %p100
      %p102 = scmp.ne.s32.totalorder %s94, %s97
      %p103 = scmp.eq.s32.totalorder %s16, 0
      %p104 = por %p102, %p103
      %p105 = scmp.ne.s32.totalorder %s94, %s97
      %p106 = scmp.eq.s32.totalorder %s21, 1
      %p107 = por %p105, %p106
      %p108 = scmp.ne.s32.totalorder %s97, %s98
      %p109 = scmp.eq.s32.totalorder %s21, 0
      %p110 = por %p108, %p109
      %p111 = scmp.ne.s32.totalorder %s97, %s98
      %p112 = scmp.eq.s32.totalorder %s22, 1
      %p113 = por %p111, %p112
      %p115 = scmp.ne.s32.totalorder %s98, %s114
      %p116 = scmp.eq.s32.totalorder %s22, 0
      %p117 = por %p115, %p116
      %s119 = sadd.s32 %s118, 1
      %p122 = scmp.eq.s32.totalorder %s16, 1
      %p123 = scmp.ne.s32.totalorder %s118, %s120
      %p124 = scmp.eq.s32.totalorder %s16, 0
      %p125 = por %p123, %p124
      %p126 = scmp.ne.s32.totalorder %s118, %s120
      %p127 = scmp.eq.s32.totalorder %s21, 1
      %p128 = por %p126, %p127
      %p129 = scmp.ne.s32.totalorder %s120, %s121
      %p130 = scmp.eq.s32.totalorder %s21, 0
      %p131 = por %p129, %p130
      %p132 = scmp.ne.s32.totalorder %s120, %s121
      %p133 = scmp.eq.s32.totalorder %s22, 1
      %p134 = por %p132, %p133
      %p136 = scmp.ne.s32.totalorder %s121, %s135
      %p137 = scmp.eq.s32.totalorder %s22, 0
      %p138 = por %p136, %p137
      %s140 = sadd.s32 %s139, 1
      %p143 = scmp.eq.s32.totalorder %s16, 1
      %p144 = scmp.ne.s32.totalorder %s139, %s141
      %p145 = scmp.eq.s32.totalorder %s16, 0
      %p146 = por %p144, %p145
      %p147 = scmp.ne.s32.totalorder %s139, %s141
      %p148 = scmp.eq.s32.totalorder %s21, 1
      %p149 = por %p147, %p148
      %p150 = scmp.ne.s32.totalorder %s141, %s142
      %p151 = scmp.eq.s32.totalorder %s21, 0
      %p152 = por %p150, %p151
      %p153 = scmp.ne.s32.totalorder %s141, %s142
      %p154 = scmp.eq.s32.totalorder %s22, 1
      %p155 = por %p153, %p154
      %p157 = scmp.ne.s32.totalorder %s142, %s156
      %p158 = scmp.eq.s32.totalorder %s22, 0
      %p159 = por %p157, %p158
      %s161 = sadd.s32 %s160, 1
      %p164 = scmp.eq.s32.totalorder %s16, 1
      %p165 = scmp.ne.s32.totalorder %s160, %s162
      %p166 = scmp.eq.s32.totalorder %s16, 0
      %p167 = por %p165, %p166
      %p168 = scmp.ne.s32.totalorder %s160, %s162
      %p169 = scmp.eq.s32.totalorder %s21, 1
      %p170 = por %p168, %p169
      %p171 = scmp.ne.s32.totalorder %s162, %s163
      %p172 = scmp.eq.s32.totalorder %s21, 0
      %p173 = por %p171, %p172
      %p174 = scmp.ne.s32.totalorder %s162, %s163
      %p175 = scmp.eq.s32.totalorder %s22, 1
      %p176 = por %p174, %p175
      %p178 = scmp.ne.s32.totalorder %s163, %s177
      %p179 = scmp.eq.s32.totalorder %s22, 0
      %p180 = por %p178, %p179
      %s182 = sadd.s32 %s181, 1
      %p185 = scmp.eq.s32.totalorder %s16, 1
      %p186 = scmp.ne.s32.totalorder %s181, %s183
      %p187 = scmp.eq.s32.totalorder %s16, 0
      %p188 = por %p186, %p187
      %p189 = scmp.ne.s32.totalorder %s181, %s183
      %p190 = scmp.eq.s32.totalorder %s21, 1
      %p191 = por %p189, %p190
      %p192 = scmp.ne.s32.totalorder %s183, %s184
      %p193 = scmp.eq.s32.totalorder %s21, 0
      %p194 = por %p192, %p193
      %p195 = scmp.ne.s32.totalorder %s183, %s184
      %p196 = scmp.eq.s32.totalorder %s22, 1
      %p197 = por %p195, %p196
      %p199 = scmp.ne.s32.totalorder %s184, %s198
      %p200 = scmp.eq.s32.totalorder %s22, 0
      %p201 = por %p199, %p200
      %s202 = ssub.s32 %s23, %s35
      %s203 = ssub.s32 %s24, %s31
      %s204 = sor.u32 %s202, %s203
      %p205 = scmp.eq.s32.totalorder %s204, 0
      %s207 = sadd.s32 %s206, 1
      %s208 = scalar_select %p205, %s206, %s207
      %p211 = pneg %p205
      %p212 = scmp.eq.s32.totalorder %s16, 1
      %p213 = por %p211, %p212
      %p214 = scmp.ne.s32.totalorder %s206, %s209
      %p215 = scmp.eq.s32.totalorder %s16, 0
      %p216 = por %p214, %p215
      %p217 = scmp.ne.s32.totalorder %s206, %s209
      %p218 = scmp.eq.s32.totalorder %s21, 1
      %p219 = por %p217, %p218
      %p220 = scmp.ne.s32.totalorder %s209, %s210
      %p221 = scmp.eq.s32.totalorder %s21, 0
      %p222 = por %p220, %p221
      %p223 = scmp.ne.s32.totalorder %s209, %s210
      %p224 = scmp.eq.s32.totalorder %s22, 1
      %p225 = por %p223, %p224
      %p227 = scmp.ne.s32.totalorder %s210, %s226
      %p228 = scmp.eq.s32.totalorder %s22, 0
      %p229 = por %p227, %p228
      %p230 = scmp.le.s32.totalorder 1, %s16
      %p231 = scmp.lt.s32.totalorder %s16, 3
      %p232 = pnand %p230, %p231
      %p233 = pneg %p232
      // Predicated region
      $region9: #{audio_noise_pre.1} parent=5 // pred_check
        _
      $region10: #{audio_noise_pre.1} parent=5 // pred_check_branch
        %235 = sbr.rel (%p232) target = $region12
      $region11: #{audio_noise_pre.1} parent=5 // pred_region
        %s236 = ssub.s32 %s16, 1
        // Predicated region
        $region13: #{audio_noise_pre.1} parent=11 // pred_check
          %p237 = pneg %p131
        $region14: #{audio_noise_pre.1} parent=11 // pred_check_branch
          %239 = sbr.rel (%p237) target = $region16
        $region15: #{audio_noise_pre.1} parent=11 // pred_region
          _
        $region16: #{audio_noise_pre.1} parent=11 // pred_fallthru
          _
        // Predicated region
        $region17: #{audio_noise_pre.1} parent=11 // pred_check
          %p240 = pneg %p152
        $region18: #{audio_noise_pre.1} parent=11 // pred_check_branch
          %242 = sbr.rel (%p240) target = $region20
        $region19: #{audio_noise_pre.1} parent=11 // pred_region
          _
        $region20: #{audio_noise_pre.1} parent=11 // pred_fallthru
          _
        // Predicated region
        $region21: #{audio_noise_pre.1} parent=11 // pred_check
          %p243 = pneg %p173
        $region22: #{audio_noise_pre.1} parent=11 // pred_check_branch
          %245 = sbr.rel (%p243) target = $region24
        $region23: #{audio_noise_pre.1} parent=11 // pred_region
          _
        $region24: #{audio_noise_pre.1} parent=11 // pred_fallthru
          _
        // Predicated region
        $region25: #{audio_noise_pre.1} parent=11 // pred_check
          %p246 = pneg %p194
        $region26: #{audio_noise_pre.1} parent=11 // pred_check_branch
          %248 = sbr.rel (%p246) target = $region28
        $region27: #{audio_noise_pre.1} parent=11 // pred_region
          _
        $region28: #{audio_noise_pre.1} parent=11 // pred_fallthru
          _
      $region12: #{audio_noise_pre.1} parent=5 // pred_fallthru
        _
      %p249 = scmp.lt.s32.totalorder %s16, 2
      // Predicated region
      $region29: #{audio_noise_pre.1} parent=5 // pred_check
        %p250 = pneg %p249
      $region30: #{audio_noise_pre.1} parent=5 // pred_check_branch
        %252 = sbr.rel (%p250) target = $region32
      $region31: #{audio_noise_pre.1} parent=5 // pred_region
        // Predicated region
        $region33: #{audio_noise_pre.1} parent=31 // pred_check
          %p253 = pneg %p50
        $region34: #{audio_noise_pre.1} parent=31 // pred_check_branch
          %255 = sbr.rel (%p253) target = $region36
        $region35: #{audio_noise_pre.1} parent=31 // pred_region
          %p256 = scmp.lt.s32.totalorder %s23, 1
          %s257 = scalar_select %p256, %s23, 1
          %p258 = scmp.lt.s32.totalorder %s24, 0
          %s259 = scalar_select %p258, %s24, 0
          %s260 = sadd.s32 %s259, %s257
          %s261 = smul.addr %s260, 8
          %s262 = scalar_lea.vmem %s0, %s261
        $region36: #{audio_noise_pre.1} parent=31 // pred_fallthru
          _
        // Predicated region
        $region37: #{audio_noise_pre.1} parent=31 // pred_check
          %p263 = pneg %p78
        $region38: #{audio_noise_pre.1} parent=31 // pred_check_branch
          %265 = sbr.rel (%p263) target = $region40
        $region39: #{audio_noise_pre.1} parent=31 // pred_region
          %p266 = scmp.lt.s32.totalorder %s23, 1
          %s267 = scalar_select %p266, %s23, 1
          %p268 = scmp.lt.s32.totalorder %s24, 0
          %s269 = scalar_select %p268, %s24, 0
          %s270 = sadd.s32 %s269, %s267
          %s271 = smul.addr %s270, 8
          %s272 = scalar_lea.vmem %s1, %s271
        $region40: #{audio_noise_pre.1} parent=31 // pred_fallthru
          _
        // Predicated region
        $region41: #{audio_noise_pre.1} parent=31 // pred_check
          %p273 = pneg %p104
        $region42: #{audio_noise_pre.1} parent=31 // pred_check_branch
          %275 = sbr.rel (%p273) target = $region44
        $region43: #{audio_noise_pre.1} parent=31 // pred_region
          %p276 = scmp.lt.s32.totalorder %s23, 1
          %s277 = scalar_select %p276, %s23, 1
          %s278 = scalar_lea.vmem %s2, %s277
        $region44: #{audio_noise_pre.1} parent=31 // pred_fallthru
          _
      $region32: #{audio_noise_pre.1} parent=5 // pred_fallthru
        _
      %p279 = scmp.le.s32.totalorder 1, %s16
      %p280 = scmp.lt.s32.totalorder %s16, 3
      %p281 = pnand %p279, %p280
      %p282 = pneg %p281
      // Predicated region
      $region45: #{audio_noise_pre.1} parent=5 // pred_check
        _
      $region46: #{audio_noise_pre.1} parent=5 // pred_check_branch
        %284 = sbr.rel (%p281) target = $region48
      $region47: #{audio_noise_pre.1} parent=5 // pred_region
        %s285 = ssub.s32 %s16, 1
        %p286 = scmp.lt.s32.totalorder %s25, 1
        %s287 = scalar_select %p286, %s25, 1
        %p288 = scmp.lt.s32.totalorder %s26, 0
        %s289 = scalar_select %p288, %s26, 0
        %s290 = sadd.s32 %s289, %s287
        %s291 = smul.addr %s290, 8
        %s292 = scalar_lea.vmem %s0, %s291
        %p293 = pneg %p56
        %p294 = pneg %p53
        %p295 = scmp.lt.s32.totalorder %s25, 1
        %s296 = scalar_select %p295, %s25, 1
        %p297 = scmp.lt.s32.totalorder %s26, 0
        %s298 = scalar_select %p297, %s26, 0
        %s299 = sadd.s32 %s298, %s296
        %s300 = smul.addr %s299, 8
        %s301 = scalar_lea.vmem %s1, %s300
        %p302 = pneg %p84
        %p303 = pneg %p81
        %p304 = scmp.lt.s32.totalorder %s25, 1
        %s305 = scalar_select %p304, %s25, 1
        %s306 = scalar_lea.vmem %s2, %s305
        %p307 = pneg %p110
        %p308 = pneg %p107
        %p309 = pneg %p131
        %p310 = pneg %p128
        %p311 = pneg %p152
        %p312 = pneg %p149
        %p313 = pneg %p173
        %p314 = pneg %p170
        %p315 = pneg %p194
        %p316 = pneg %p191
        %p317 = pneg %p222
        %p318 = pneg %p219
        %s319 = sand.u32 %s209, 1
        %s320 = scalar_lea.sflag [#allocation3], %s319
        %s321 = sand.u32 %s209, 1
        %s322 = smul.addr %s321, 8
        %s323 = scalar_lea.vmem [#allocation2], %s322
        %p324 = scmp.lt.s32.totalorder %s25, 1
        %s325 = scalar_select %p324, %s25, 1
        %p326 = scmp.lt.s32.totalorder %s26, 0
        %s327 = scalar_select %p326, %s26, 0
        %s328 = sadd.s32 %s327, %s325
        %s329 = smul.addr %s328, 8
        %s330 = scalar_lea.vmem %s0, %s329
        %p331 = scmp.lt.s32.totalorder %s25, 1
        %s332 = scalar_select %p331, %s25, 1
        %p333 = scmp.lt.s32.totalorder %s26, 0
        %s334 = scalar_select %p333, %s26, 0
        %s335 = sadd.s32 %s334, %s332
        %s336 = smul.addr %s335, 8
        %s337 = scalar_lea.vmem %s1, %s336
        %p338 = scmp.lt.s32.totalorder %s25, 1
        %s339 = scalar_select %p338, %s25, 1
        %s340 = scalar_lea.vmem %s2, %s339
        %v341 = vld [vmem:[%s330] sm:$0xff]
        %v342 = vld [vmem:[%s337] sm:$0xff]
        %v343 = vld [vmem:[%s3] sm:$0xff]
        %v344 = vld [vmem:[%s3 + $0x8] sm:$0xff]
        %v345 = vld [vmem:[%s3 + $0x10] sm:$0xff]
        %v346 = vld [vmem:[%s3 + $0x18] sm:$0xff]
        %v347 = vld [vmem:[%s4] sm:$0xff]
        %v348 = vld [vmem:[%s4 + $0x8] sm:$0xff]
        %v349 = vld [vmem:[%s4 + $0x10] sm:$0xff]
        %v350 = vld [vmem:[%s4 + $0x18] sm:$0xff]
        %vm351 = vcmask 261120
        %v353 = vsel %vm351, %v342, 0
        %355 = vmatprep.subr.mxu0 0.0
        %356 = vmatpush1.msra.mxu0 %v347
        %357 = vmatprep.subr.mxu0 0.0
        %358 = vmatpush1.msra.mxu0 %v348
        %359 = vmatprep.subr.mxu0 0.0
        %360 = vmatpush1.msra.mxu0 %v349
        %361 = vmatprep.subr.mxu0 0.0
        %362 = vmatpush1.msra.mxu0 %v350
        %363 = vmatprep.subr.mxu0 0.0
        %364 = vmatpush1.msra.mxu0 0.0
        %365 = vmatprep.subr.mxu0 0.0
        %366 = vmatpush1.msra.mxu0 0.0
        %367 = vmatprep.subr.mxu0 0.0
        %368 = vmatpush1.msra.mxu0 0.0
        %369 = vmatprep.subr.mxu0 0.0
        %370 = vmatpush1.msra.mxu0 0.0
        %371 = vmatprep.subr.mxu0 0.0
        %372 = vmatpush1.msra.mxu0 0.0
        %373 = vmatprep.subr.mxu0 0.0
        %374 = vmatpush1.msra.mxu0 0.0
        %375 = vmatprep.subr.mxu0 0.0
        %376 = vmatpush1.msra.mxu0 0.0
        %377 = vmatprep.subr.mxu0 0.0
        %378 = vmatpush1.msra.mxu0 0.0
        %379 = vmatprep.subr.mxu0 0.0
        %380 = vmatpush1.msra.mxu0 0.0
        %381 = vmatprep.subr.mxu0 0.0
        %382 = vmatpush1.msra.mxu0 0.0
        %383 = vmatprep.subr.mxu0 0.0
        %384 = vmatpush1.msra.mxu0 0.0
        %385 = vmatprep.subr.mxu0 0.0
        %386 = vmatpush1.msra.mxu0 0.0
        %387 = vmatprep.subr.mxu0 0.0
        %388 = vmatpush1.msra.mxu0 0.0
        %389 = vmatprep.subr.mxu0 0.0
        %390 = vmatpush1.msra.mxu0 0.0
        %391 = vmatprep.subr.mxu0 0.0
        %392 = vmatpush1.msra.mxu0 0.0
        %393 = vmatprep.subr.mxu0 0.0
        %394 = vmatpush1.msra.mxu0 0.0
        %395 = vmatprep.subr.mxu0 0.0
        %396 = vmatpush1.msra.mxu0 0.0
        %397 = vmatprep.subr.mxu0 0.0
        %398 = vmatpush1.msra.mxu0 0.0
        %399 = vmatprep.subr.mxu0 0.0
        %400 = vmatpush1.msra.mxu0 0.0
        %401 = vmatprep.subr.mxu0 0.0
        %402 = vmatpush1.msra.mxu0 0.0
        %403 = vmatprep.subr.mxu0 0.0
        %404 = vmatpush1.msra.mxu0 0.0
        %405 = vmatprep.subr.mxu0 0.0
        %406 = vmatpush1.msra.mxu0 0.0
        %407 = vmatprep.subr.mxu0 0.0
        %408 = vmatpush1.msra.mxu0 0.0
        %409 = vmatprep.subr.mxu0 0.0
        %410 = vmatpush1.msra.mxu0 0.0
        %411 = vmatprep.subr.mxu0 0.0
        %412 = vmatpush1.msra.mxu0 0.0
        %413 = vmatprep.subr.mxu0 0.0
        %414 = vmatpush1.msra.mxu0 0.0
        %415 = vmatprep.subr.mxu0 0.0
        %416 = vmatpush1.msra.mxu0 0.0
        %417 = vmatprep.subr.mxu0 0.0
        %418 = vmatpush1.msra.mxu0 0.0
        %419 = vmatprep.mubr.f32.mxu0 0.0
        %420 = vmatmul.mubr.f32.gmra.mrb[0].mxu0 %v353
        %v421 = vpop.f32.mrb[0].mxu0
        %v422 = vadd.f32 0.0, %v421
        %v423 = vpop.f32.mrb[0].mxu0
        %424 = vdwg.mxu0
        %v426 = vsel %vm351, %v341, 0
        %428 = vmatprep.subr.mxu0 0.0
        %429 = vmatpush1.msra.mxu0 %v343
        %430 = vmatprep.subr.mxu0 0.0
        %431 = vmatpush1.msra.mxu0 %v344
        %432 = vmatprep.subr.mxu0 0.0
        %433 = vmatpush1.msra.mxu0 %v345
        %434 = vmatprep.subr.mxu0 0.0
        %435 = vmatpush1.msra.mxu0 %v346
        %436 = vmatprep.subr.mxu0 0.0
        %437 = vmatpush1.msra.mxu0 0.0
        %438 = vmatprep.subr.mxu0 0.0
        %439 = vmatpush1.msra.mxu0 0.0
        %440 = vmatprep.subr.mxu0 0.0
        %441 = vmatpush1.msra.mxu0 0.0
        %442 = vmatprep.subr.mxu0 0.0
        %443 = vmatpush1.msra.mxu0 0.0
        %444 = vmatprep.subr.mxu0 0.0
        %445 = vmatpush1.msra.mxu0 0.0
        %446 = vmatprep.subr.mxu0 0.0
        %447 = vmatpush1.msra.mxu0 0.0
        %448 = vmatprep.subr.mxu0 0.0
        %449 = vmatpush1.msra.mxu0 0.0
        %450 = vmatprep.subr.mxu0 0.0
        %451 = vmatpush1.msra.mxu0 0.0
        %452 = vmatprep.subr.mxu0 0.0
        %453 = vmatpush1.msra.mxu0 0.0
        %454 = vmatprep.subr.mxu0 0.0
        %455 = vmatpush1.msra.mxu0 0.0
        %456 = vmatprep.subr.mxu0 0.0
        %457 = vmatpush1.msra.mxu0 0.0
        %458 = vmatprep.subr.mxu0 0.0
        %459 = vmatpush1.msra.mxu0 0.0
        %460 = vmatprep.subr.mxu0 0.0
        %461 = vmatpush1.msra.mxu0 0.0
        %462 = vmatprep.subr.mxu0 0.0
        %463 = vmatpush1.msra.mxu0 0.0
        %464 = vmatprep.subr.mxu0 0.0
        %465 = vmatpush1.msra.mxu0 0.0
        %466 = vmatprep.subr.mxu0 0.0
        %467 = vmatpush1.msra.mxu0 0.0
        %468 = vmatprep.subr.mxu0 0.0
        %469 = vmatpush1.msra.mxu0 0.0
        %470 = vmatprep.subr.mxu0 0.0
        %471 = vmatpush1.msra.mxu0 0.0
        %472 = vmatprep.subr.mxu0 0.0
        %473 = vmatpush1.msra.mxu0 0.0
        %474 = vmatprep.subr.mxu0 0.0
        %475 = vmatpush1.msra.mxu0 0.0
        %476 = vmatprep.subr.mxu0 0.0
        %477 = vmatpush1.msra.mxu0 0.0
        %478 = vmatprep.subr.mxu0 0.0
        %479 = vmatpush1.msra.mxu0 0.0
        %480 = vmatprep.subr.mxu0 0.0
        %481 = vmatpush1.msra.mxu0 0.0
        %482 = vmatprep.subr.mxu0 0.0
        %483 = vmatpush1.msra.mxu0 0.0
        %484 = vmatprep.subr.mxu0 0.0
        %485 = vmatpush1.msra.mxu0 0.0
        %486 = vmatprep.subr.mxu0 0.0
        %487 = vmatpush1.msra.mxu0 0.0
        %488 = vmatprep.subr.mxu0 0.0
        %489 = vmatpush1.msra.mxu0 0.0
        %490 = vmatprep.subr.mxu0 0.0
        %491 = vmatpush1.msra.mxu0 0.0
        %492 = vmatprep.mubr.f32.mxu0 0.0
        %493 = vmatmul.mubr.f32.gmra.mrb[0].mxu0 %v426
        %v494 = vpop.f32.mrb[0].mxu0
        %v495 = vadd.f32 %v422, %v494
        %v496 = vpop.f32.mrb[0].mxu0
        %497 = vdwg.mxu0
        %v498 = vld [vmem:[%s340] sm:$0x1]
        %v500 = vlaneseq
        %v501 = vshrl.u32 %v500, 7
        %v502 = vsub.s32 0, %v501
        %v503 = vrot.slane %v498, %v502
        %v505 = vadd.f32 %v495, %v503
        %v506 = vxor.u32 %v505, 2147483648
        %v507 = vmul.f32 %v506, 1.442695
        %v508 = vpow.pop %v507
        %v509 = vadd.f32 %v508, 1.0
        %v510 = vrcp.pop %v509
        %v511 = vmul.f32 1.0, %v510
        %v512 = vmul.f32 %v505, %v511
        %v513 = vld [vmem:[%s5] sm:$0xff]
        %v514 = vld [vmem:[%s5 + $0x8] sm:$0xff]
        %v515 = vld [vmem:[%s6] sm:$0x1]
        %v517 = vlaneseq
        %v518 = vshrl.u32 %v517, 7
        %v519 = vsub.s32 0, %v518
        %v520 = vrot.slane %v515, %v519
        %vm522 = vcmask 130048
        %v524 = vsel %vm522, %v512, 0
        %526 = vmatprep.subr.mxu0 0.0
        %527 = vmatpush1.msra.mxu0 %v513
        %528 = vmatprep.subr.mxu0 0.0
        %529 = vmatpush1.msra.mxu0 %v514
        %530 = vmatprep.subr.mxu0 0.0
        %531 = vmatpush1.msra.mxu0 0.0
        %532 = vmatprep.subr.mxu0 0.0
        %533 = vmatpush1.msra.mxu0 0.0
        %534 = vmatprep.subr.mxu0 0.0
        %535 = vmatpush1.msra.mxu0 0.0
        %536 = vmatprep.subr.mxu0 0.0
        %537 = vmatpush1.msra.mxu0 0.0
        %538 = vmatprep.subr.mxu0 0.0
        %539 = vmatpush1.msra.mxu0 0.0
        %540 = vmatprep.subr.mxu0 0.0
        %541 = vmatpush1.msra.mxu0 0.0
        %542 = vmatprep.subr.mxu0 0.0
        %543 = vmatpush1.msra.mxu0 0.0
        %544 = vmatprep.subr.mxu0 0.0
        %545 = vmatpush1.msra.mxu0 0.0
        %546 = vmatprep.subr.mxu0 0.0
        %547 = vmatpush1.msra.mxu0 0.0
        %548 = vmatprep.subr.mxu0 0.0
        %549 = vmatpush1.msra.mxu0 0.0
        %550 = vmatprep.subr.mxu0 0.0
        %551 = vmatpush1.msra.mxu0 0.0
        %552 = vmatprep.subr.mxu0 0.0
        %553 = vmatpush1.msra.mxu0 0.0
        %554 = vmatprep.subr.mxu0 0.0
        %555 = vmatpush1.msra.mxu0 0.0
        %556 = vmatprep.subr.mxu0 0.0
        %557 = vmatpush1.msra.mxu0 0.0
        %558 = vmatprep.subr.mxu0 0.0
        %559 = vmatpush1.msra.mxu0 0.0
        %560 = vmatprep.subr.mxu0 0.0
        %561 = vmatpush1.msra.mxu0 0.0
        %562 = vmatprep.subr.mxu0 0.0
        %563 = vmatpush1.msra.mxu0 0.0
        %564 = vmatprep.subr.mxu0 0.0
        %565 = vmatpush1.msra.mxu0 0.0
        %566 = vmatprep.subr.mxu0 0.0
        %567 = vmatpush1.msra.mxu0 0.0
        %568 = vmatprep.subr.mxu0 0.0
        %569 = vmatpush1.msra.mxu0 0.0
        %570 = vmatprep.subr.mxu0 0.0
        %571 = vmatpush1.msra.mxu0 0.0
        %572 = vmatprep.subr.mxu0 0.0
        %573 = vmatpush1.msra.mxu0 0.0
        %574 = vmatprep.subr.mxu0 0.0
        %575 = vmatpush1.msra.mxu0 0.0
        %576 = vmatprep.subr.mxu0 0.0
        %577 = vmatpush1.msra.mxu0 0.0
        %578 = vmatprep.subr.mxu0 0.0
        %579 = vmatpush1.msra.mxu0 0.0
        %580 = vmatprep.subr.mxu0 0.0
        %581 = vmatpush1.msra.mxu0 0.0
        %582 = vmatprep.subr.mxu0 0.0
        %583 = vmatpush1.msra.mxu0 0.0
        %584 = vmatprep.subr.mxu0 0.0
        %585 = vmatpush1.msra.mxu0 0.0
        %586 = vmatprep.subr.mxu0 0.0
        %587 = vmatpush1.msra.mxu0 0.0
        %588 = vmatprep.subr.mxu0 0.0
        %589 = vmatpush1.msra.mxu0 0.0
        %590 = vmatprep.mubr.f32.mxu0 0.0
        %591 = vmatmul.mubr.f32.gmra.mrb[0].mxu0 %v524
        %v592 = vpop.f32.mrb[0].mxu0
        %v593 = vadd.f32 %v520, %v592
        %v594 = vpop.f32.mrb[0].mxu0
        %595 = vdwg.mxu0
        %596 = vst.msk [vmem:[%s323] sm:$0xff] %vm351, %v593
        %s597 = sand.u32 %s209, 1
        %s598 = scalar_lea.sflag [#allocation3], %s597
        %s599 = sand.u32 %s209, 1
        %s600 = smul.addr %s599, 8
        %s601 = scalar_lea.vmem [#allocation2], %s600
        // Predicated region
        $region49: #{audio_noise_pre.1} parent=47 // pred_check
          %p602 = pneg %p219
        $region50: #{audio_noise_pre.1} parent=47 // pred_check_branch
          %604 = sbr.rel (%p602) target = $region52
        $region51: #{audio_noise_pre.1} parent=47 // pred_region
          %s606 = ssub.s32 128, 128
          %607 = vsyncadd %s598, %s606
          %s608 = sadd.s32 %s26, %s25
          %s609 = smul.addr %s608, 128
          %s610 = scalar_lea.hbm %s7, %s609
          %s612 = sshll.u32 %s601, 4
          %s613 = int_to_ptr.vmem [resolvable:$true] %s612
          %615 = dma.vmem_to_hbm [thread:$0]  %s613, 128, %s610, %s598
        $region52: #{audio_noise_pre.1} parent=47 // pred_fallthru
          _
      $region48: #{audio_noise_pre.1} parent=5 // pred_fallthru
        _
      %p616 = scmp.le.s32.totalorder 2, %s16
      // Predicated region
      $region53: #{audio_noise_pre.1} parent=5 // pred_check
        %p617 = pneg %p616
      $region54: #{audio_noise_pre.1} parent=5 // pred_check_branch
        %619 = sbr.rel (%p617) target = $region56
      $region55: #{audio_noise_pre.1} parent=5 // pred_region
        %s620 = ssub.s32 %s16, 2
        // Predicated region
        $region57: #{audio_noise_pre.1} parent=55 // pred_check
          %p621 = pneg %p225
        $region58: #{audio_noise_pre.1} parent=55 // pred_check_branch
          %623 = sbr.rel (%p621) target = $region60
        $region59: #{audio_noise_pre.1} parent=55 // pred_region
          %s624 = sand.u32 %s210, 1
          %s625 = scalar_lea.sflag [#allocation3], %s624
          %s626 = sand.u32 %s210, 1
          %s627 = smul.addr %s626, 8
          %s628 = scalar_lea.vmem [#allocation2], %s627
          %629 = dma.done %s625, 128
        $region60: #{audio_noise_pre.1} parent=55 // pred_fallthru
          _
      $region56: #{audio_noise_pre.1} parent=5 // pred_fallthru
        _
    $region6: #{audio_noise_pre.1} parent=1 // loop_footer
      %s20 = sadd.s32 1, %s16
    $region7: #{audio_noise_pre.1} parent=1 // loop_footer_branch
      %15 = sbr.rel target = $region3
    $region8: #{audio_noise_pre.1} parent=1 // loop_exit
      _
    %630 = vsyncpa [#allocation3], 1
    %s631 = scalar_lea.sflag [#allocation3], 1
    %632 = vsyncpa %s631, 1

</llo_original>
